<compile_context>
chip_gen: v6e
topology: v6e:2x2x1
jax: 0.10.0
libtpu: 0.0.40
codegen_flags: <defaults>
</compile_context>

<pallas_src>
import functools

import jax
import jax.numpy as jnp
from jax.experimental import pallas as pl
from jax.experimental.pallas import tpu as pltpu


def _label_smoothing_kernel(x_ref, tgt_ref, out_ref, *,
                            smoothing: float, confidence: float, n_rows: int):
    tm, c = x_ref.shape
    xf = x_ref[...].astype(jnp.float32)            # (tm, C) promote once (in vregs)
    tgt = tgt_ref[...]                             # (tm, 1) int32

    # Per-row reductions (lane axis -> XLU).
    m = jnp.max(xf, axis=-1, keepdims=True)        # (tm, 1)
    shifted = xf - m                               # only consumer: exp (stability)
    lse = jnp.log(jnp.sum(jnp.exp(shifted), axis=-1, keepdims=True))   # (tm, 1)

    x_sum = jnp.sum(xf, axis=-1, keepdims=True)    # (tm, 1)
    classes = jax.lax.broadcasted_iota(jnp.int32, (1, c), 1)            # (1, C)
    x_tgt = jnp.sum(jnp.where(classes == tgt, xf, 0.0),
                    axis=-1, keepdims=True)        # (tm, 1)  == x[row, target]

    # loss = lse - conf*(x[tgt]-m) - smooth*((sum(x)-C*m)/C)   (conf+smooth == 1)
    loss_rows = (lse
                 - confidence * (x_tgt - m)
                 - smoothing * ((x_sum - c * m) * (1.0 / c)))

    # Mask rows past the end of the batch (partial last tile, no host padding).
    base = pl.program_id(0) * tm
    row_ids = base + jax.lax.broadcasted_iota(jnp.int32, (tm, 1), 0)
    tile_sum = jnp.sum(jnp.where(row_ids < n_rows, loss_rows, 0.0))

    # One full (8, 128) vreg per tile -> unmasked store; host reads [i, 0, 0].
    out_ref[...] = jnp.broadcast_to(tile_sum, out_ref.shape).astype(jnp.float32)


def _pick_tile(n, c, itemsize, tm=None):
    """Pick the row tile and an explicit scoped-VMEM limit for this chip."""
    mib = 1024 * 1024
    try:
        vmem_cap = int(pltpu.get_tpu_info().vmem_capacity_bytes)
    except Exception:
        vmem_cap = 64 * mib                      # conservative (v7x-sized) fallback
    budget = 40 * mib if vmem_cap <= 64 * mib else 80 * mib

    # Per-row VMEM cost: 2x double-buffered native logits row, ~3 f32 full-width
    # intermediates (compiler scratch), 2x lane-padded (row,1)->(row,128) target.
    per_row = 2 * c * itemsize + 3 * c * 4 + 2 * 128 * 4
    pack = max(8, 32 // itemsize)                # sublane packing: 8 f32 / 16 bf16 / 32 i8

    if tm is None:
        tm = (budget // per_row) // pack * pack
        tm = int(max(pack, min(tm, 8192)))
        if n <= pack:
            tm = n                               # full-dim block (allowed by Mosaic)
        else:
            tm = min(tm, (n // pack) * pack)     # last block may be partial (masked)

    vmem_limit = tm * per_row + 4 * mib
    vmem_limit = int(min(max(vmem_limit, 16 * mib), max(vmem_cap - 8 * mib, 16 * mib)))
    return tm, vmem_limit


def label_smoothing_loss(x, target, smoothing=0.0, tm=None):
    """Pallas equivalent of LabelSmoothing(smoothing)(x, target).

    x:      (N, C) float logits (f32 or bf16)
    target: (N,)   integer class indices
    returns scalar f32 loss
    """
    N, C = x.shape
    itemsize = jnp.dtype(x.dtype).itemsize
    tm, vmem_limit = _pick_tile(N, C, itemsize, tm)
    n_tiles = pl.cdiv(N, tm)

    target2d = target.astype(jnp.int32).reshape(N, 1)

    kernel = functools.partial(_label_smoothing_kernel,
                               smoothing=float(smoothing),
                               confidence=1.0 - float(smoothing),
                               n_rows=N)

    cost = pl.CostEstimate(
        flops=6 * N * C,
        transcendentals=N * C,
        bytes_accessed=N * C * itemsize + N * 4 + n_tiles * 8 * 128 * 4,
    )

    partials = pl.pallas_call(
        kernel,
        out_shape=jax.ShapeDtypeStruct((n_tiles, 8, 128), jnp.float32),
        grid_spec=pltpu.PrefetchScalarGridSpec(
            num_scalar_prefetch=0,
            grid=(n_tiles,),
            in_specs=[
                pl.BlockSpec((tm, C), lambda i: (i, 0)),   # logits tile (native dtype)
                pl.BlockSpec((tm, 1), lambda i: (i, 0)),   # per-row targets
            ],
            out_specs=pl.BlockSpec((1, 8, 128), lambda i: (i, 0, 0)),
        ),
        compiler_params=pltpu.CompilerParams(
            # Each grid step writes a distinct output block -> fully parallel
            # (usable by both v7x TensorCores).
            dimension_semantics=("parallel",),
            vmem_limit_bytes=vmem_limit,
        ),
        cost_estimate=cost,
    )(x, target2d)

    # Final mean over per-tile partial sums (padded/tail rows already masked to 0).
    return jnp.sum(partials[:, 0, 0]) / jnp.float32(N)


def _reference_loss(x, target, smoothing):
    confidence = 1.0 - smoothing
    logprobs = jax.nn.log_softmax(x.astype(jnp.float32), axis=-1)
    nll = -jnp.take_along_axis(logprobs, target[:, None].astype(jnp.int32),
                               axis=-1)[:, 0]
    smooth = -jnp.mean(logprobs, axis=-1)
    return jnp.mean(confidence * nll + smoothing * smooth)


if __name__ == "__main__":
    key = jax.random.PRNGKey(0)
    k1, k2, k3, k4 = jax.random.split(key, 4)

    # Case 1: aligned shapes (single tile).
    N, C = 16, 128
    smoothing = 0.1
    x = jax.random.normal(k1, (N, C), dtype=jnp.float32)
    target = jax.random.randint(k2, (N,), 0, C, dtype=jnp.int32)
    loss = jax.block_until_ready(label_smoothing_loss(x, target, smoothing))
    ref = _reference_loss(x, target, smoothing)
    assert jnp.allclose(loss, ref, rtol=1e-5, atol=1e-5), (loss, ref)

    # Case 2: ragged batch / odd class count (exercises the masked partial tile,
    # no host-side padding of x).
    N2, C2 = 10, 40
    x2 = jax.random.normal(k3, (N2, C2), dtype=jnp.float32)
    target2 = jax.random.randint(k4, (N2,), 0, C2, dtype=jnp.int32)
    loss2 = jax.block_until_ready(label_smoothing_loss(x2, target2, 0.2))
    ref2 = _reference_loss(x2, target2, 0.2)
    assert jnp.allclose(loss2, ref2, rtol=1e-5, atol=1e-5), (loss2, ref2)

    print("KERNEL_OK")
</pallas_src>

<mosaic_0001>
module attributes {stable_mosaic.version = 11 : i64} {
  func.func @_label_smoothing_kernel(%arg0: i32, %arg1: memref<16x128xf32, #tpu.memory_space<vmem>>, %arg2: memref<16x1xi32, #tpu.memory_space<vmem>>, %arg3: memref<1x8x128xf32, #tpu.memory_space<vmem>>) attributes {dimension_semantics = [#tpu.dimension_semantics<parallel>], iteration_bounds = array<i64: 1>, scalar_prefetch = 0 : i64, scratch_operands = 0 : i64, tpu.core_type = #tpu.core_type<tc>, window_params = [{transform_indices = @transform_0, window_bounds = array<i64: 16, 128>}, {transform_indices = @transform_1, window_bounds = array<i64: 16, 1>}, {transform_indices = @transform_2, window_bounds = array<i64: 1, 8, 128>}]} {
    %c0 = arith.constant 0 : index
    %c0_0 = arith.constant 0 : index
    %0 = vector.load %arg1[%c0, %c0_0] : memref<16x128xf32, #tpu.memory_space<vmem>>, vector<16x128xf32>
    %c0_1 = arith.constant 0 : index
    %c0_2 = arith.constant 0 : index
    %1 = vector.load %arg2[%c0_1, %c0_2] : memref<16x1xi32, #tpu.memory_space<vmem>>, vector<16x1xi32>
    %cst = arith.constant dense<0xFF800000> : vector<16xf32>
    %2 = vector.multi_reduction <maximumf>, %0, %cst [1] : vector<16x128xf32> to vector<16xf32>
    %3 = vector.shape_cast %2 : vector<16xf32> to vector<16x1xf32>
    %4 = vector.broadcast %3 : vector<16x1xf32> to vector<16x128xf32>
    %5 = arith.subf %0, %4 : vector<16x128xf32>
    %6 = math.exp %5 : vector<16x128xf32>
    %cst_3 = arith.constant dense<0.000000e+00> : vector<16xf32>
    %7 = vector.multi_reduction <add>, %6, %cst_3 [1] : vector<16x128xf32> to vector<16xf32>
    %8 = vector.shape_cast %7 : vector<16xf32> to vector<16x1xf32>
    %9 = math.log %8 : vector<16x1xf32>
    %cst_4 = arith.constant dense<0.000000e+00> : vector<16xf32>
    %10 = vector.multi_reduction <add>, %0, %cst_4 [1] : vector<16x128xf32> to vector<16xf32>
    %11 = vector.shape_cast %10 : vector<16xf32> to vector<16x1xf32>
    %12 = tpu.iota {dimensions = array<i32: 1>} : vector<1x128xi32>
    %13 = vector.broadcast %12 : vector<1x128xi32> to vector<16x128xi32>
    %14 = vector.broadcast %1 : vector<16x1xi32> to vector<16x128xi32>
    %15 = arith.cmpi eq, %13, %14 : vector<16x128xi32>
    %cst_5 = arith.constant 0.000000e+00 : f32
    %16 = vector.broadcast %cst_5 : f32 to vector<16x128xf32>
    %17 = arith.select %15, %0, %16 : vector<16x128xi1>, vector<16x128xf32>
    %cst_6 = arith.constant dense<0.000000e+00> : vector<16xf32>
    %18 = vector.multi_reduction <add>, %17, %cst_6 [1] : vector<16x128xf32> to vector<16xf32>
    %19 = vector.shape_cast %18 : vector<16xf32> to vector<16x1xf32>
    %20 = arith.subf %19, %3 : vector<16x1xf32>
    %cst_7 = arith.constant 0.899999976 : f32
    %21 = vector.broadcast %cst_7 : f32 to vector<16x1xf32>
    %22 = arith.mulf %21, %20 : vector<16x1xf32>
    %23 = arith.subf %9, %22 : vector<16x1xf32>
    %cst_8 = arith.constant 1.280000e+02 : f32
    %24 = vector.broadcast %cst_8 : f32 to vector<16x1xf32>
    %25 = arith.mulf %24, %3 : vector<16x1xf32>
    %26 = arith.subf %11, %25 : vector<16x1xf32>
    %cst_9 = arith.constant 7.812500e-03 : f32
    %27 = vector.broadcast %cst_9 : f32 to vector<16x1xf32>
    %28 = arith.mulf %26, %27 : vector<16x1xf32>
    %cst_10 = arith.constant 1.000000e-01 : f32
    %29 = vector.broadcast %cst_10 : f32 to vector<16x1xf32>
    %30 = arith.mulf %29, %28 : vector<16x1xf32>
    %31 = arith.subf %23, %30 : vector<16x1xf32>
    %c16_i32 = arith.constant 16 : i32
    %32 = arith.muli %arg0, %c16_i32 : i32
    %33 = tpu.iota {dimensions = array<i32: 0>} : vector<16x1xi32>
    %34 = vector.broadcast %32 : i32 to vector<16x1xi32>
    %35 = arith.addi %34, %33 : vector<16x1xi32>
    %c16_i32_11 = arith.constant 16 : i32
    %36 = vector.broadcast %c16_i32_11 : i32 to vector<16x1xi32>
    %37 = arith.cmpi slt, %35, %36 : vector<16x1xi32>
    %cst_12 = arith.constant 0.000000e+00 : f32
    %38 = vector.broadcast %cst_12 : f32 to vector<16x1xf32>
    %39 = arith.select %37, %31, %38 : vector<16x1xi1>, vector<16x1xf32>
    %40 = vector.shape_cast %39 : vector<16x1xf32> to vector<1x16x1xf32>
    %cst_13 = arith.constant dense<0.000000e+00> : vector<1xf32>
    %41 = vector.multi_reduction <add>, %40, %cst_13 [1, 2] : vector<1x16x1xf32> to vector<1xf32>
    %42 = vector.shape_cast %41 : vector<1xf32> to vector<1x1x1xf32>
    %43 = vector.extract %42[0, 0, 0] : f32 from vector<1x1x1xf32>
    %44 = vector.broadcast %43 : f32 to vector<1x8x128xf32>
    %c0_14 = arith.constant 0 : index
    %c0_15 = arith.constant 0 : index
    %c0_16 = arith.constant 0 : index
    %45 = vector.load %arg3[%c0_14, %c0_15, %c0_16] : memref<1x8x128xf32, #tpu.memory_space<vmem>>, vector<1x8x128xf32>
    tpu.vector_store %arg3[%c0_14, %c0_15, %c0_16], %44 {strides = array<i32>} : memref<1x8x128xf32, #tpu.memory_space<vmem>>, vector<1x8x128xf32>,
    return
  }
  func.func @transform_0(%arg0: i32) -> (i32, i32) {
    %c0_i32 = arith.constant 0 : i32
    %c0_i32_0 = arith.constant 0 : i32
    return %arg0, %c0_i32 : i32, i32
  }
  func.func @transform_1(%arg0: i32) -> (i32, i32) {
    %c0_i32 = arith.constant 0 : i32
    %c0_i32_0 = arith.constant 0 : i32
    return %arg0, %c0_i32 : i32, i32
  }
  func.func @transform_2(%arg0: i32) -> (i32, i32, i32) {
    %c0_i32 = arith.constant 0 : i32
    %c0_i32_0 = arith.constant 0 : i32
    %c0_i32_1 = arith.constant 0 : i32
    return %arg0, %c0_i32, %c0_i32_0 : i32, i32, i32
  }
}

</mosaic_0001>

<llo_original>
// kernel: tpu_custom_call.1
$region0: #{tpu_custom_call.1}
  #allocation0 [shape = 'u32[]', space=smem, size = 0x4, offset = 0x4, fixed_abs, tag = 'smem constant byte address 0x4 - core index']
  #allocation1 [shape = 'u32[144,128]{1,0:T(1,128)}', space=vmem, size = 0x12000, scoped, tag = 'internal scratch']
  %s0 = inlined_call_operand.vmem [shape: f32[16,128], index: 0, kind: input, shape index: {}]
  %s1 = inlined_call_operand.vmem [shape: s32[16,1], index: 1, kind: input, shape index: {}]
  %s2 = inlined_call_operand.hbm [shape: f32[1,8,128], index: 2, kind: output, shape index: {}]
  %s3 = sld [smem:[#allocation0]]
  $region18: #{tpu_custom_call.1} parent=0
    _
  %s5 = ssub.s32 1, %s3
  %s6 = scalar_select 0, %s5, %s3
  $region1: #{tpu_custom_call.1} parent=0
    #allocation2 [shape = 'u8[4096]{0}', space=vmem, size = 0x1000, scoped, tag = 'output window, operand 0, single buffered']
    #allocation3 [shape = 's32[1]{0}', space=sflag, size = 0x4, scoped, tag = 'scoped memory for tpu_custom_call.1']
    %7 = vsyncpa [#allocation3], 0
    // Predicated region
    $region2: #{tpu_custom_call.1} parent=1 // pred_check
      _
    $region3: #{tpu_custom_call.1} parent=1 // pred_check_branch
      %9 = sbr.rel (0) target = $region5
    $region4: #{tpu_custom_call.1} parent=1 // pred_region
      _
    $region5: #{tpu_custom_call.1} parent=1 // pred_fallthru
      _
    // Predicated region
    $region6: #{tpu_custom_call.1} parent=1 // pred_check
      _
    $region7: #{tpu_custom_call.1} parent=1 // pred_check_branch
      %11 = sbr.rel (0) target = $region9
    $region8: #{tpu_custom_call.1} parent=1 // pred_region
      _
    $region9: #{tpu_custom_call.1} parent=1 // pred_fallthru
      _
    %v12 = vld [vmem:[%s0] sm:$0xff]
    %v13 = vld [vmem:[%s0 + $0x8] sm:$0xff]
    %v14 = vld [vmem:[%s1] sm:$0xff]
    %v15 = vld [vmem:[%s1 + $0x8] sm:$0xff]
    %16 = vmax.xlane.f32.xlu0 %v12
    %v17 = vpop.xlane.xlu0 %16
    %18 = vmax.xlane.f32.xlu0 %v13
    %v19 = vpop.xlane.xlu0 %18
    %v20 = vsub.f32 %v12, %v17
    %v21 = vsub.f32 %v13, %v19
    %v22 = vmul.f32 %v20, 1.442695
    %v23 = vpow.pop %v22
    %v24 = vmul.f32 %v21, 1.442695
    %v25 = vpow.pop %v24
    %26 = vadd.xlane.f32.xlu0 %v23
    %v27 = vpop.xlane.xlu0 %26
    %28 = vadd.xlane.f32.xlu0 %v25
    %v29 = vpop.xlane.xlu0 %28
    %v30 = vlog2.pop %v27
    %v31 = vmul.f32 %v30, 0.6931472
    %v32 = vlog2.pop %v29
    %v33 = vmul.f32 %v32, 0.6931472
    %34 = vadd.xlane.f32.xlu0 %v12
    %v35 = vpop.xlane.xlu0 %34
    %36 = vadd.xlane.f32.xlu0 %v13
    %v37 = vpop.xlane.xlu0 %36
    %v38 = vlaneseq
    %v39 = vand.u32 %v38, 127
    %40 = vset.pattern.permute.xlu0 0
    %41 = vperm.xlu0 %40, %v14
    %v42 = vpop.permute.xlu0 %41
    %43 = vset.pattern.permute.xlu0 0
    %44 = vperm.xlu0 %43, %v15
    %v45 = vpop.permute.xlu0 %44
    %vm46 = vcmp.eq.s32.totalorder %v39, %v42
    %vm47 = vcmp.eq.s32.totalorder %v39, %v45
    %v48 = vsel %vm46, %v12, 0.0
    %v49 = vsel %vm47, %v13, 0.0
    %50 = vadd.xlane.f32.xlu0 %v48
    %v51 = vpop.xlane.xlu0 %50
    %52 = vadd.xlane.f32.xlu0 %v49
    %v53 = vpop.xlane.xlu0 %52
    %v54 = vsub.f32 %v51, %v17
    %v55 = vsub.f32 %v53, %v19
    %v56 = vmul.f32 %v54, 0.9
    %v57 = vmul.f32 %v55, 0.9
    %v58 = vsub.f32 %v31, %v56
    %v59 = vsub.f32 %v33, %v57
    %v60 = vmul.f32 %v17, 128.0
    %v61 = vmul.f32 %v19, 128.0
    %v62 = vsub.f32 %v35, %v60
    %v63 = vsub.f32 %v37, %v61
    %v64 = vmul.f32 %v62, 0.0078125
    %v65 = vmul.f32 %v63, 0.0078125
    %v66 = vmul.f32 %v64, 0.1
    %v67 = vmul.f32 %v65, 0.1
    %v68 = vsub.f32 %v58, %v66
    %v69 = vsub.f32 %v59, %v67
    %s70 = smul.u32 0, 16
    %v71 = vlaneseq
    %v72 = vshrl.u32 %v71, 7
    %v73 = vadd.s32 %v72, 8
    %v74 = vstv %s70
    %v75 = vadd.s32 %v74, %v72
    %v76 = vadd.s32 %v74, %v73
    %vm77 = vcmp.lt.s32.totalorder %v75, 16
    %vm78 = vcmp.lt.s32.totalorder %v76, 16
    %v79 = vsel %vm77, %v68, 0.0
    %v80 = vsel %vm78, %v69, 0.0
    %vm81 = vcmask 7168
    %v82 = vsel %vm81, %v79, 0.0
    %v83 = vsel %vm81, %v80, 0.0
    %v84 = vadd.f32 %v82, %v83
    %85 = vadd.xlane.f32.xlu0 %v84
    %v86 = vpop.xlane.xlu0 %85
    %v87 = vrot.slane %v86, 4
    %v88 = vadd.f32 %v86, %v87
    %v89 = vrot.slane %v88, 2
    %v90 = vadd.f32 %v88, %v89
    %v91 = vrot.slane %v90, 1
    %v92 = vadd.f32 %v90, %v91
    %s93 = vtos %v92
    %v94 = vstv %s93
    %95 = vst [vmem:[#allocation2] sm:$0xff] %v94
    // Predicated region
    $region10: #{tpu_custom_call.1} parent=1 // pred_check
      _
    $region11: #{tpu_custom_call.1} parent=1 // pred_check_branch
      %97 = sbr.rel (0) target = $region13
    $region12: #{tpu_custom_call.1} parent=1 // pred_region
      %s99 = ssub.s32 128, 128
      %100 = vsyncadd [#allocation3], %s99
      %s102 = sshll.u32 [#allocation2], 4
      %s103 = int_to_ptr.vmem [resolvable:$true] %s102
      %105 = dma.vmem_to_hbm [thread:$0]  %s103, 128, %s2, [#allocation3]
    $region13: #{tpu_custom_call.1} parent=1 // pred_fallthru
      _
    // Predicated region
    $region14: #{tpu_custom_call.1} parent=1 // pred_check
      _
    $region15: #{tpu_custom_call.1} parent=1 // pred_check_branch
      %107 = sbr.rel (0) target = $region17
    $region16: #{tpu_custom_call.1} parent=1 // pred_region
      %108 = dma.done [#allocation3], 128
    $region17: #{tpu_custom_call.1} parent=1 // pred_fallthru
      _
    %109 = vsyncpa [#allocation3], 1

</llo_original>
